<compile_context>
chip_gen: v5e
topology: v5e:2x2
jax: 0.10.0
libtpu: 0.0.40
codegen_flags: <defaults>
</compile_context>

<pallas_src>
import functools

import jax
import jax.numpy as jnp
from jax import lax
from jax.experimental import pallas as pl
from jax.experimental.pallas import tpu as pltpu

LANE = 128   # lane width (minor dim of every vreg / MXU tile)
PACK = 16    # bf16 sublane packing (16 rows per vreg)


def _round_up(x, m):
    return (x + m - 1) // m * m


# ----------------------------- Pallas kernel --------------------------------
def conv_block_kernel(p_ref, w_ref, b_ref, o_ref):
    # p_ref: (KCKp, TM)  bf16 im2col patch columns (M on lanes), streamed
    # w_ref: (COp, KCKp) bf16 reshaped conv weight, resident across grid
    # b_ref: (COp, 1)    f32 bias column
    # o_ref: (COp, TM)   f32 output tile (lane-dense along M)
    acc = jnp.dot(w_ref[...], p_ref[...], preferred_element_type=jnp.float32)
    o_ref[...] = acc + b_ref[...]


# ------------------------------ JAX glue -------------------------------------
def _im2col_T(x_bf, K, stride, padding):
    """x_bf: (N, C, H, W) bf16 (ReLU already applied if requested).

    Returns patches_T of shape (C*K*K, N*Ho*Wo) with row order (c, ki, kj),
    matching torch weight.reshape(C_out, C_in*K*K).  Only x (1x input size) is
    transposed; the 4x-sized patch tensor is emitted directly in final layout.
    """
    N, C, H, W = x_bf.shape
    xc = jnp.transpose(x_bf, (1, 0, 2, 3))                      # (C, N, H, W)
    xc = jnp.pad(xc, ((0, 0), (0, 0), (padding, padding), (padding, padding)))
    Ho = (H + 2 * padding - K) // stride + 1
    Wo = (W + 2 * padding - K) // stride + 1
    slabs = []
    for ki in range(K):
        for kj in range(K):
            slabs.append(
                xc[:, :, ki:ki + stride * Ho:stride, kj:kj + stride * Wo:stride]
            )                                                    # (C, N, Ho, Wo)
    p = jnp.stack(slabs, axis=1)                                 # (C, K*K, N, Ho, Wo)
    p = p.reshape(C * K * K, N * Ho * Wo)                        # (KCK, M)
    return p, Ho, Wo


def _tpu_layout_info():
    """(tensorcores_per_chip, per-core VMEM budget in bytes) — conservative."""
    try:
        kind = jax.devices()[0].device_kind.lower()
    except Exception:
        kind = ""
    if "v7" in kind:
        return 2, 32 * 1024 * 1024     # v7x: 64 MiB physical / TC, 2 TCs
    return 1, 48 * 1024 * 1024         # v5e / v6e: 1 TC, 128 MiB physical


def _choose_tile_m(M, KCKp, COp, n_cores, vmem_budget):
    """tile_m is the lane dim of both the streamed patch block and the output
    block -> multiple of 128.  Pick the largest tile that fits the VMEM budget
    (amortizes the ~0.35us/step overhead and maximizes DMA burst size), but on
    multi-TC chips keep at least one grid step per TensorCore."""
    n128 = max(1, _round_up(M, LANE) // LANE)
    per_group = 2 * (KCKp * LANE * 2) + 2 * (COp * LANE * 4)   # dbl-buffered in/out
    fixed = KCKp * COp * 2 + COp * 4 + (1 << 20)               # weight/bias + slack
    budget_groups = max(1, (vmem_budget - fixed) // per_group)
    groups = min(n128, budget_groups, 4096 // LANE)            # >=85% roofline by 512
    if n_cores > 1:
        groups = min(groups, max(1, n128 // n_cores))
    return int(groups) * LANE


@functools.partial(jax.jit, static_argnames=("kernel_size", "stride", "padding",
                                             "activation", "tile_m"))
def conv_block_forward(x, weight, bias, *, kernel_size=4, stride=2, padding=1,
                       activation=True, tile_m=None):
    """x: (N, C_in, H, W) NCHW f32.  weight: (C_out, C_in, K, K).  bias: (C_out,)."""
    N, C_in, H, W = x.shape
    C_out = weight.shape[0]
    K = kernel_size
    KCK = C_in * K * K

    # ReLU folded into the prologue pass (before the bf16 cast); this fuses with
    # the cast/transpose in XLA, is mathematically identical to conv(relu(x)),
    # and keeps bf16 max off the VPU (v5e has no bf16 VALU).
    xr = jnp.maximum(x, 0.0) if activation else x
    x_bf = xr.astype(jnp.bfloat16)

    patches_T, Ho, Wo = _im2col_T(x_bf, K, stride, padding)      # (KCK, M) bf16
    M = N * Ho * Wo

    # Pad only to hardware layout minimums: contraction dim to the bf16 sublane
    # pack (16) — NOT to 128 (that would e.g. double patch bytes for KCK=64) —
    # and C_out to 16 (bf16 weight packing; f32 output sublane needs 8).
    KCKp = _round_up(KCK, PACK)
    COp = _round_up(C_out, PACK)

    w2d = weight.reshape(C_out, KCK).astype(jnp.bfloat16)        # (C_out, KCK)
    w2d = jnp.pad(w2d, ((0, COp - C_out), (0, KCKp - KCK)))      # (COp, KCKp)
    b2d = jnp.pad(bias.astype(jnp.float32).reshape(C_out, 1),
                  ((0, COp - C_out), (0, 0)))                    # (COp, 1)

    n_cores, vmem_budget = _tpu_layout_info()
    if tile_m is None:
        tile_m = _choose_tile_m(M, KCKp, COp, n_cores, vmem_budget)
    assert tile_m % LANE == 0, tile_m
    Mp = _round_up(M, tile_m)
    patches_T = jnp.pad(patches_T, ((0, KCKp - KCK), (0, Mp - M)))

    grid = (Mp // tile_m,)

    # Explicit VMEM limit derived from the actual working set (+ margin).
    need = (2 * KCKp * tile_m * 2 + 2 * COp * tile_m * 4
            + KCKp * COp * 2 + COp * 4)
    vmem_limit = int(min(vmem_budget, max(2 * need + (2 << 20), 8 << 20)))

    cost = pl.CostEstimate(
        flops=2 * M * KCK * C_out,
        transcendentals=0,
        bytes_accessed=KCKp * Mp * 2 + KCKp * COp * 2 + COp * Mp * 4,
    )

    out2d = pl.pallas_call(
        conv_block_kernel,
        out_shape=jax.ShapeDtypeStruct((COp, Mp), jnp.float32),
        grid=grid,
        in_specs=[
            pl.BlockSpec((KCKp, tile_m), lambda i: (0, i)),   # streamed patch cols
            pl.BlockSpec((COp, KCKp), lambda i: (0, 0)),      # weight (resident)
            pl.BlockSpec((COp, 1), lambda i: (0, 0)),         # bias   (resident)
        ],
        out_specs=pl.BlockSpec((COp, tile_m), lambda i: (0, i)),
        compiler_params=pltpu.CompilerParams(
            dimension_semantics=("parallel",),
            vmem_limit_bytes=vmem_limit,
        ),
        cost_estimate=cost,
    )(patches_T, w2d, b2d)

    # Epilogue: drop padding, return f32 NCHW to match the PyTorch module.
    # Single fused pass over the final-size tensor (slice+reshape+transpose).
    out = out2d[:C_out, :M].reshape(C_out, N, Ho, Wo).transpose(1, 0, 2, 3)
    return out


# ------------------------------ reference ------------------------------------
def conv_block_reference(x, weight, bias, *, stride=2, padding=1, activation=True):
    xr = x.astype(jnp.float32)
    if activation:
        xr = jnp.maximum(xr, 0.0)
    out = lax.conv_general_dilated(
        xr, weight.astype(jnp.float32),
        window_strides=(stride, stride),
        padding=((padding, padding), (padding, padding)),
        dimension_numbers=("NCHW", "OIHW", "NCHW"),
    )
    return out + bias.reshape(1, -1, 1, 1)


# --------------------------------- main ---------------------------------------
if __name__ == "__main__":
    key = jax.random.PRNGKey(0)
    k_x, k_w, k_b = jax.random.split(key, 3)

    N, C_in, H, W = 2, 4, 16, 16
    C_out, K, stride, padding = 8, 4, 2, 1

    x = jax.random.normal(k_x, (N, C_in, H, W), dtype=jnp.float32)

    # Deterministic PyTorch-style uniform(-1/sqrt(fan_in), +) init.
    fan_in = C_in * K * K
    bound = 1.0 / (fan_in ** 0.5)
    weight = jax.random.uniform(k_w, (C_out, C_in, K, K), jnp.float32, -bound, bound)
    bias = jax.random.uniform(k_b, (C_out,), jnp.float32, -bound, bound)

    # activation=True path (conv(relu(x))).
    out = conv_block_forward(x, weight, bias, kernel_size=K, stride=stride,
                             padding=padding, activation=True)
    out = jax.block_until_ready(out)
    ref = conv_block_reference(x, weight, bias, stride=stride, padding=padding,
                               activation=True)
    assert out.shape == (N, C_out, H // 2, W // 2), out.shape
    assert jnp.allclose(out, ref, atol=2e-2, rtol=2e-2), \
        float(jnp.abs(out - ref).max())

    # activation=False path (plain conv).
    out_na = conv_block_forward(x, weight, bias, kernel_size=K, stride=stride,
                                padding=padding, activation=False)
    out_na = jax.block_until_ready(out_na)
    ref_na = conv_block_reference(x, weight, bias, stride=stride, padding=padding,
                                  activation=False)
    assert jnp.allclose(out_na, ref_na, atol=2e-2, rtol=2e-2), \
        float(jnp.abs(out_na - ref_na).max())

    print("KERNEL_OK")
</pallas_src>

<mosaic_0001>
module attributes {stable_mosaic.version = 11 : i64} {
  func.func @conv_block_kernel(%arg0: i32, %arg1: memref<64x128xbf16, #tpu.memory_space<vmem>>, %arg2: memref<16x64xbf16, #tpu.memory_space<vmem>>, %arg3: memref<16x1xf32, #tpu.memory_space<vmem>>, %arg4: memref<16x128xf32, #tpu.memory_space<vmem>>) attributes {dimension_semantics = [#tpu.dimension_semantics<parallel>], iteration_bounds = array<i64: 1>, scalar_prefetch = 0 : i64, scratch_operands = 0 : i64, tpu.core_type = #tpu.core_type<tc>, window_params = [{transform_indices = @transform_0, window_bounds = array<i64: 64, 128>}, {pipeline_mode = #tpu.pipeline_mode<synchronous>, transform_indices = @transform_1, window_bounds = array<i64: 16, 64>}, {pipeline_mode = #tpu.pipeline_mode<synchronous>, transform_indices = @transform_2, window_bounds = array<i64: 16, 1>}, {transform_indices = @transform_3, window_bounds = array<i64: 16, 128>}]} {
    %c0 = arith.constant 0 : index
    %c0_0 = arith.constant 0 : index
    %0 = vector.load %arg2[%c0, %c0_0] : memref<16x64xbf16, #tpu.memory_space<vmem>>, vector<16x64xbf16>
    %c0_1 = arith.constant 0 : index
    %c0_2 = arith.constant 0 : index
    %1 = vector.load %arg1[%c0_1, %c0_2] : memref<64x128xbf16, #tpu.memory_space<vmem>>, vector<64x128xbf16>
    %cst = arith.constant dense<0.000000e+00> : vector<16x128xf32>
    %2 = tpu.matmul %0, %1, %cst {dimension_numbers = #tpu.dot_dimension_numbers<[1], [0], [0], [1], [0, 0, 1, 1], [], []>} : vector<16x64xbf16>, vector<64x128xbf16>, vector<16x128xf32> -> vector<16x128xf32>
    %c0_3 = arith.constant 0 : index
    %c0_4 = arith.constant 0 : index
    %3 = vector.load %arg3[%c0_3, %c0_4] : memref<16x1xf32, #tpu.memory_space<vmem>>, vector<16x1xf32>
    %4 = vector.broadcast %3 : vector<16x1xf32> to vector<16x128xf32>
    %5 = arith.addf %2, %4 : vector<16x128xf32>
    %c0_5 = arith.constant 0 : index
    %c0_6 = arith.constant 0 : index
    %6 = vector.load %arg4[%c0_5, %c0_6] : memref<16x128xf32, #tpu.memory_space<vmem>>, vector<16x128xf32>
    tpu.vector_store %arg4[%c0_5, %c0_6], %5 {strides = array<i32>} : memref<16x128xf32, #tpu.memory_space<vmem>>, vector<16x128xf32>,
    return
  }
  func.func @transform_0(%arg0: i32) -> (i32, i32) {
    %c0_i32 = arith.constant 0 : i32
    %c0_i32_0 = arith.constant 0 : i32
    return %c0_i32, %arg0 : i32, i32
  }
  func.func @transform_1(%arg0: i32) -> (i32, i32) {
    %c0_i32 = arith.constant 0 : i32
    %c0_i32_0 = arith.constant 0 : i32
    %c0_i32_1 = arith.constant 0 : i32
    return %c0_i32, %c0_i32_0 : i32, i32
  }
  func.func @transform_2(%arg0: i32) -> (i32, i32) {
    %c0_i32 = arith.constant 0 : i32
    %c0_i32_0 = arith.constant 0 : i32
    %c0_i32_1 = arith.constant 0 : i32
    return %c0_i32, %c0_i32_0 : i32, i32
  }
  func.func @transform_3(%arg0: i32) -> (i32, i32) {
    %c0_i32 = arith.constant 0 : i32
    %c0_i32_0 = arith.constant 0 : i32
    return %c0_i32, %arg0 : i32, i32
  }
}

</mosaic_0001>

<llo_original>
// kernel: conv_block_forward.1
$region0: #{conv_block_forward.1}
  #allocation0 [shape = 'u32[]', space=smem, size = 0x4, offset = 0x4, fixed_abs, tag = 'smem constant byte address 0x4 - core index']
  #allocation1 [shape = 'u32[72,128]{1,0:T(1,128)}', space=vmem, size = 0x9000, scoped, tag = 'internal scratch']
  %s0 = inlined_call_operand.vmem [shape: bf16[64,128], index: 0, kind: input, shape index: {}]
  %s1 = inlined_call_operand.vmem [shape: bf16[16,64], index: 1, kind: input, shape index: {}]
  %s2 = inlined_call_operand.vmem [shape: f32[16,1], index: 2, kind: input, shape index: {}]
  %s3 = inlined_call_operand.vmem [shape: f32[16,128], index: 3, kind: output, shape index: {}]
  %s4 = sld [smem:[#allocation0]]
  $region22: #{conv_block_forward.1} parent=0
    _
  %s6 = ssub.s32 1, %s4
  %s7 = scalar_select 0, %s6, %s4
  // Predicated region
  $region2: #{conv_block_forward.1} parent=0 // pred_check
    _
  $region3: #{conv_block_forward.1} parent=0 // pred_check_branch
    %9 = sbr.rel (0) target = $region5
  $region4: #{conv_block_forward.1} parent=0 // pred_region
    _
  $region5: #{conv_block_forward.1} parent=0 // pred_fallthru
    _
  // Predicated region
  $region6: #{conv_block_forward.1} parent=0 // pred_check
    _
  $region7: #{conv_block_forward.1} parent=0 // pred_check_branch
    %11 = sbr.rel (0) target = $region9
  $region8: #{conv_block_forward.1} parent=0 // pred_region
    _
  $region9: #{conv_block_forward.1} parent=0 // pred_fallthru
    _
  // Predicated region
  $region10: #{conv_block_forward.1} parent=0 // pred_check
    _
  $region11: #{conv_block_forward.1} parent=0 // pred_check_branch
    %13 = sbr.rel (0) target = $region13
  $region12: #{conv_block_forward.1} parent=0 // pred_region
    _
  $region13: #{conv_block_forward.1} parent=0 // pred_fallthru
    _
  %v15 = vld [vmem:[%s1] sm:$0xf]
  %v16 = vld [vmem:[%s1 + $0x4] sm:$0xf]
  %v17 = vld [vmem:[%s0] sm:$0xf]
  %v18 = vld [vmem:[%s0 + $0x4] sm:$0xf]
  %v19 = vld [vmem:[%s0 + $0x8] sm:$0xf]
  %v20 = vld [vmem:[%s0 + $0xc] sm:$0xf]
  %v21 = vld [vmem:[%s0 + $0x10] sm:$0xf]
  %v22 = vld [vmem:[%s0 + $0x14] sm:$0xf]
  %v23 = vld [vmem:[%s0 + $0x18] sm:$0xf]
  %v24 = vld [vmem:[%s0 + $0x1c] sm:$0xf]
  %v25 = vld [vmem:[%s2] sm:$0xff]
  %v26 = vld [vmem:[%s2 + $0x8] sm:$0xff]
  %28 = vset.pattern.permute.xlu0 0
  %29 = vperm.xlu0 %28, %v25
  %v30 = vpop.permute.xlu0 %29
  %33 = vset.pattern.permute.xlu0 0
  %34 = vperm.xlu0 %33, %v26
  %v35 = vpop.permute.xlu0 %34
  %v39 = vunpack.c.l.b16 %v15
  %v40 = vunpack.c.l.b16 %v16
  %v41 = vpack.c.b16 %v40, %v39
  %v50 = vunpack.c.l.b16 %v17
  %v51 = vunpack.c.l.b16 %v18
  %v52 = vunpack.c.l.b16 %v19
  %v53 = vunpack.c.l.b16 %v20
  %v54 = vunpack.c.l.b16 %v21
  %v55 = vunpack.c.l.b16 %v22
  %v56 = vunpack.c.l.b16 %v23
  %v57 = vunpack.c.l.b16 %v24
  %v58 = vpack.c.b16 %v51, %v50
  %v59 = vpack.c.b16 %v53, %v52
  %v60 = vpack.c.b16 %v55, %v54
  %v61 = vpack.c.b16 %v57, %v56
  %vm66 = vcmask 523264
  %v68 = vsel %vm66, %v41, 0
  %70 = vmatpush.bf16.msra.mxu0 0
  %71 = vmatpush.bf16.msra.mxu0 0
  %72 = vmatpush.bf16.msra.mxu0 0
  %73 = vmatpush.bf16.msra.mxu0 0
  %74 = vmatpush.bf16.msra.mxu0 %v61
  %75 = vmatpush.bf16.msra.mxu0 %v60
  %76 = vmatpush.bf16.msra.mxu0 %v59
  %77 = vmatpush.bf16.msra.mxu0 %v58
  %78 = vmatmul.bf16.gmra.mxu0 %v68
  %v79 = vpop.f32.mrf.mxu0
  %v80 = vadd.f32 %v30, %v79
  %v81 = vpop.f32.mrf.mxu0
  %v82 = vadd.f32 %v35, %v81
  %83 = vdwg.mxu0
  %84 = vst [vmem:[%s3] sm:$0xff] %v80
  %85 = vst [vmem:[%s3 + $0x8] sm:$0xff] %v82
  // Predicated region
  $region14: #{conv_block_forward.1} parent=0 // pred_check
    _
  $region15: #{conv_block_forward.1} parent=0 // pred_check_branch
    %87 = sbr.rel (0) target = $region17
  $region16: #{conv_block_forward.1} parent=0 // pred_region
    _
  $region17: #{conv_block_forward.1} parent=0 // pred_fallthru
    _
  // Predicated region
  $region18: #{conv_block_forward.1} parent=0 // pred_check
    _
  $region19: #{conv_block_forward.1} parent=0 // pred_check_branch
    %89 = sbr.rel (0) target = $region21
  $region20: #{conv_block_forward.1} parent=0 // pred_region
    _
  $region21: #{conv_block_forward.1} parent=0 // pred_fallthru
    _

</llo_original>
